<compile_context>
chip_gen: v7x
topology: tpu7x:2x2x1
jax: 0.10.0
libtpu: 0.0.40
codegen_flags: <defaults>
</compile_context>

<pallas_src>
import jax
import jax.numpy as jnp
from jax.experimental import pallas as pl
from jax.experimental.pallas import tpu as pltpu


def _round_up(x: int, m: int) -> int:
    return ((x + m - 1) // m) * m


def _matmul_bn_prelu_kernel(a_ref, b_ref, ssa_ref, o_ref, acc_ref):
    """acc += A @ B over the k grid axis; BN affine + PReLU on last k step."""
    k = pl.program_id(2)

    @pl.when(k == 0)
    def _():
        acc_ref[...] = jnp.zeros_like(acc_ref)

    acc_ref[...] += jnp.dot(a_ref[...], b_ref[...],
                            preferred_element_type=jnp.float32)

    @pl.when(k == pl.num_programs(2) - 1)
    def _():
        ssa = ssa_ref[...]                       # (3, tn): scale / shift / alpha
        y = acc_ref[...] * ssa[0:1, :] + ssa[1:2, :]
        y = jnp.where(y >= 0, y, ssa[2:3, :] * y)
        o_ref[...] = y.astype(o_ref.dtype)


def _matmul_bn_prelu_single_k_kernel(a_ref, b_ref, ssa_ref, o_ref):
    """Single-K-step fast path: no accumulator scratch, no branches."""
    acc = jnp.dot(a_ref[...], b_ref[...], preferred_element_type=jnp.float32)
    ssa = ssa_ref[...]                           # (3, tn)
    y = acc * ssa[0:1, :] + ssa[1:2, :]
    y = jnp.where(y >= 0, y, ssa[2:3, :] * y)
    o_ref[...] = y.astype(o_ref.dtype)


def conv_block2_forward(x, weight, bias, bn_gamma, bn_beta, bn_mean, bn_var,
                        prelu_alpha, *, stride=2, eps=1e-5):
    """Pallas implementation of ConvBlock2.forward (NCHW input)."""
    N, C_in, H, W = x.shape
    C_out, _, KH, KW = weight.shape

    # --- 1) ReflectionPad2d(1); cast to bf16 up-front so all downstream ----
    #        layout plumbing moves half the HBM bytes.
    x_bf = x.astype(jnp.bfloat16)
    x_pad = jnp.pad(x_bf, ((0, 0), (0, 0), (1, 1), (1, 1)), mode="reflect")
    Hp, Wp = H + 2, W + 2
    H_out = (Hp - KH) // stride + 1
    W_out = (Wp - KW) // stride + 1

    # --- 2) im2col in NHWC: lane-contiguous, channel-minor tap concat -------
    x_nhwc = x_pad.transpose(0, 2, 3, 1)               # (N, Hp, Wp, C_in)
    cols = []
    for kh in range(KH):
        for kw in range(KW):
            cols.append(
                x_nhwc[:, kh: kh + stride * (H_out - 1) + 1: stride,
                          kw: kw + stride * (W_out - 1) + 1: stride, :])
    patches = jnp.concatenate(cols, axis=-1)           # (N, Ho, Wo, KH*KW*C_in)

    M = N * H_out * W_out
    K = KH * KW * C_in
    a = patches.reshape(M, K)                                      # bf16 (M, K)
    # Reorder weights to (KH, KW, C_in, C_out) so K ordering matches `a`.
    b = weight.transpose(2, 3, 1, 0).reshape(K, C_out).astype(jnp.bfloat16)

    # --- 3) Fold conv bias + inference BatchNorm into scale/shift -----------
    inv_std = 1.0 / jnp.sqrt(bn_var.astype(jnp.float32) + eps)
    scale = bn_gamma.astype(jnp.float32) * inv_std                     # (C_out,)
    shift = (bn_beta.astype(jnp.float32)
             + scale * (bias.astype(jnp.float32) - bn_mean.astype(jnp.float32)))
    alpha = jnp.broadcast_to(
        jnp.asarray(prelu_alpha, jnp.float32).reshape(-1), (C_out,))
    ssa = jnp.stack([scale, shift, alpha], axis=0)                 # (3, C_out)

    # --- 4) Tile selection ---------------------------------------------------
    # Lane (N) axis: collapse the j grid axis when C_out fits in one tile so A
    # streams from HBM exactly once.
    N_p = _round_up(C_out, 128)
    if N_p <= 512:
        tn = N_p
    else:
        tn = next(t for t in (512, 256, 128) if N_p % t == 0)

    # Contraction (K) axis.
    K_p = _round_up(K, 128)
    tk = next(t for t in (512, 384, 256, 128) if K_p % t == 0)

    # Row (M) axis: big tiles amortize the ~0.35us/step overhead; keep >= 2
    # M blocks when the problem allows so both v7x TensorCores get work.
    tm = 128
    for cand in (1024, 512, 256, 128):
        if _round_up(M, cand) // cand >= 2 or cand == 128:
            tm = cand
            break
    tm = min(tm, _round_up(M, 128))
    M_p = _round_up(M, tm)
    # Worst-case double-buffered working set (bf16 A/B, f32 out + acc) stays
    # well under 16 MiB, so this fits the default scoped VMEM on all chips.

    # --- 5) Pad to tile multiples (bf16 operands, packed f32 epilogue vec) ---
    a_p = jnp.pad(a, ((0, M_p - M), (0, K_p - K)))
    b_p = jnp.pad(b, ((0, K_p - K), (0, N_p - C_out)))
    ssa_p = jnp.pad(ssa, ((0, 0), (0, N_p - C_out)))

    out_dtype = x.dtype
    single_k = (K_p == tk)

    if single_k:
        grid = (M_p // tm, N_p // tn)
        kernel = _matmul_bn_prelu_single_k_kernel
        in_specs = [
            pl.BlockSpec((tm, K_p), lambda i, j: (i, 0)),   # im2col patches
            pl.BlockSpec((K_p, tn), lambda i, j: (0, j)),   # weights^T
            pl.BlockSpec((3, tn), lambda i, j: (0, j)),     # scale/shift/alpha
        ]
        out_specs = pl.BlockSpec((tm, tn), lambda i, j: (i, j))
        scratch_shapes = []
        dim_sem = ("parallel", "parallel")
    else:
        grid = (M_p // tm, N_p // tn, K_p // tk)
        kernel = _matmul_bn_prelu_kernel
        in_specs = [
            pl.BlockSpec((tm, tk), lambda i, j, k: (i, k)),
            pl.BlockSpec((tk, tn), lambda i, j, k: (k, j)),
            pl.BlockSpec((3, tn), lambda i, j, k: (0, j)),
        ]
        out_specs = pl.BlockSpec((tm, tn), lambda i, j, k: (i, j))
        scratch_shapes = [pltpu.VMEM((tm, tn), jnp.float32)]
        dim_sem = ("parallel", "parallel", "arbitrary")

    out_p = pl.pallas_call(
        kernel,
        out_shape=jax.ShapeDtypeStruct((M_p, N_p), out_dtype),
        grid_spec=pltpu.PrefetchScalarGridSpec(
            num_scalar_prefetch=0,
            grid=grid,
            in_specs=in_specs,
            out_specs=out_specs,
            scratch_shapes=scratch_shapes,
        ),
        compiler_params=pltpu.CompilerParams(
            dimension_semantics=dim_sem,
            vmem_limit_bytes=32 * 1024 * 1024,
        ),
    )(a_p, b_p, ssa_p)

    # --- 6) Strip padding, back to NCHW --------------------------------------
    out = out_p[:M, :C_out].reshape(N, H_out, W_out, C_out)
    return out.transpose(0, 3, 1, 2)


if __name__ == "__main__":
    key = jax.random.PRNGKey(0)
    k_x, k_w, k_b = jax.random.split(key, 3)

    N, C_in, H, W = 2, 4, 16, 16
    C_out = 8

    x = jax.random.normal(k_x, (N, C_in, H, W), dtype=jnp.float32)
    weight = 0.1 * jax.random.normal(k_w, (C_out, C_in, 3, 3), dtype=jnp.float32)
    bias = 0.1 * jax.random.normal(k_b, (C_out,), dtype=jnp.float32)

    # BatchNorm2d defaults (inference): gamma=1, beta=0, mean=0, var=1.
    bn_gamma = jnp.ones((C_out,), jnp.float32)
    bn_beta = jnp.zeros((C_out,), jnp.float32)
    bn_mean = jnp.zeros((C_out,), jnp.float32)
    bn_var = jnp.ones((C_out,), jnp.float32)
    prelu_alpha = jnp.float32(0.25)   # nn.PReLU() default

    y = conv_block2_forward(x, weight, bias, bn_gamma, bn_beta, bn_mean,
                            bn_var, prelu_alpha)
    y = jax.block_until_ready(y)

    # Pure-JAX reference for correctness.
    def ref_forward(x, weight, bias, gamma, beta, mean, var, alpha, eps=1e-5):
        xp = jnp.pad(x, ((0, 0), (0, 0), (1, 1), (1, 1)), mode="reflect")
        r = jax.lax.conv_general_dilated(
            xp, weight, window_strides=(2, 2), padding="VALID",
            dimension_numbers=("NCHW", "OIHW", "NCHW"))
        r = r + bias[None, :, None, None]
        r = ((r - mean[None, :, None, None])
             * (gamma[None, :, None, None]
                / jnp.sqrt(var[None, :, None, None] + eps))
             + beta[None, :, None, None])
        return jnp.where(r >= 0, r, alpha * r)

    y_ref = ref_forward(x, weight, bias, bn_gamma, bn_beta, bn_mean, bn_var,
                        prelu_alpha)

    assert y.shape == (N, C_out, H // 2, W // 2), y.shape
    assert y.dtype == x.dtype
    # bf16 MXU operands -> keep a bf16-level tolerance.
    assert jnp.allclose(y, y_ref, atol=5e-2, rtol=1e-2), float(
        jnp.max(jnp.abs(y - y_ref)))

    print("KERNEL_OK")
</pallas_src>

<mosaic_0001>
module attributes {stable_mosaic.version = 11 : i64} {
  func.func @_matmul_bn_prelu_single_k_kernel(%arg0: i32, %arg1: i32, %arg2: memref<128x128xbf16, #tpu.memory_space<vmem>>, %arg3: memref<128x128xbf16, #tpu.memory_space<vmem>>, %arg4: memref<3x128xf32, #tpu.memory_space<vmem>>, %arg5: memref<128x128xf32, #tpu.memory_space<vmem>>) attributes {dimension_semantics = [#tpu.dimension_semantics<parallel>, #tpu.dimension_semantics<parallel>], iteration_bounds = array<i64: 1, 1>, scalar_prefetch = 0 : i64, scratch_operands = 0 : i64, tpu.core_type = #tpu.core_type<tc>, window_params = [{transform_indices = @transform_0, window_bounds = array<i64: 128, 128>}, {transform_indices = @transform_1, window_bounds = array<i64: 128, 128>}, {transform_indices = @transform_2, window_bounds = array<i64: 3, 128>}, {transform_indices = @transform_3, window_bounds = array<i64: 128, 128>}]} {
    %c0 = arith.constant 0 : index
    %c0_0 = arith.constant 0 : index
    %0 = vector.load %arg2[%c0, %c0_0] : memref<128x128xbf16, #tpu.memory_space<vmem>>, vector<128x128xbf16>
    %c0_1 = arith.constant 0 : index
    %c0_2 = arith.constant 0 : index
    %1 = vector.load %arg3[%c0_1, %c0_2] : memref<128x128xbf16, #tpu.memory_space<vmem>>, vector<128x128xbf16>
    %cst = arith.constant dense<0.000000e+00> : vector<128x128xf32>
    %2 = tpu.matmul %0, %1, %cst {dimension_numbers = #tpu.dot_dimension_numbers<[1], [0], [0], [1], [0, 0, 1, 1], [], []>} : vector<128x128xbf16>, vector<128x128xbf16>, vector<128x128xf32> -> vector<128x128xf32>
    %c0_3 = arith.constant 0 : index
    %c0_4 = arith.constant 0 : index
    %3 = vector.load %arg4[%c0_3, %c0_4] : memref<3x128xf32, #tpu.memory_space<vmem>>, vector<3x128xf32>
    %4 = vector.extract_strided_slice %3 {offsets = [0, 0], sizes = [1, 128], strides = [1, 1]} : vector<3x128xf32> to vector<1x128xf32>
    %5 = vector.broadcast %4 : vector<1x128xf32> to vector<128x128xf32>
    %6 = arith.mulf %2, %5 : vector<128x128xf32>
    %7 = vector.extract_strided_slice %3 {offsets = [1, 0], sizes = [1, 128], strides = [1, 1]} : vector<3x128xf32> to vector<1x128xf32>
    %8 = vector.broadcast %7 : vector<1x128xf32> to vector<128x128xf32>
    %9 = arith.addf %6, %8 : vector<128x128xf32>
    %cst_5 = arith.constant 0.000000e+00 : f32
    %10 = vector.broadcast %cst_5 : f32 to vector<128x128xf32>
    %11 = arith.cmpf oge, %9, %10 : vector<128x128xf32>
    %12 = vector.extract_strided_slice %3 {offsets = [2, 0], sizes = [1, 128], strides = [1, 1]} : vector<3x128xf32> to vector<1x128xf32>
    %13 = vector.broadcast %12 : vector<1x128xf32> to vector<128x128xf32>
    %14 = arith.mulf %13, %9 : vector<128x128xf32>
    %15 = arith.select %11, %9, %14 : vector<128x128xi1>, vector<128x128xf32>
    %c0_6 = arith.constant 0 : index
    %c0_7 = arith.constant 0 : index
    %16 = vector.load %arg5[%c0_6, %c0_7] : memref<128x128xf32, #tpu.memory_space<vmem>>, vector<128x128xf32>
    tpu.vector_store %arg5[%c0_6, %c0_7], %15 {strides = array<i32>} : memref<128x128xf32, #tpu.memory_space<vmem>>, vector<128x128xf32>,
    return
  }
  func.func @transform_0(%arg0: i32, %arg1: i32) -> (i32, i32) {
    %c0_i32 = arith.constant 0 : i32
    %c0_i32_0 = arith.constant 0 : i32
    return %arg0, %c0_i32 : i32, i32
  }
  func.func @transform_1(%arg0: i32, %arg1: i32) -> (i32, i32) {
    %c0_i32 = arith.constant 0 : i32
    %c0_i32_0 = arith.constant 0 : i32
    return %c0_i32, %arg1 : i32, i32
  }
  func.func @transform_2(%arg0: i32, %arg1: i32) -> (i32, i32) {
    %c0_i32 = arith.constant 0 : i32
    %c0_i32_0 = arith.constant 0 : i32
    return %c0_i32, %arg1 : i32, i32
  }
  func.func @transform_3(%arg0: i32, %arg1: i32) -> (i32, i32) {
    %c0_i32 = arith.constant 0 : i32
    return %arg0, %arg1 : i32, i32
  }
}

</mosaic_0001>

<llo_original>
// kernel: tpu_custom_call.1
$region0: #{tpu_custom_call.1}
  #allocation0 [shape = 'u32[]', space=smem, size = 0x4, offset = 0x4, fixed_abs, tag = 'smem constant byte address 0x4 - core index']
  #allocation1 [shape = 'u32[144,128]{1,0:T(1,128)}', space=vmem, size = 0x12000, scoped, tag = 'internal scratch']
  %s0 = inlined_call_operand.hbm [shape: bf16[128,128], index: 0, kind: input, shape index: {}]
  %s1 = inlined_call_operand.hbm [shape: bf16[128,128], index: 1, kind: input, shape index: {}]
  %s2 = inlined_call_operand.vmem [shape: f32[3,128], index: 2, kind: input, shape index: {}]
  %s3 = inlined_call_operand.hbm [shape: f32[128,128], index: 3, kind: output, shape index: {}]
  %s4 = sld [smem:[#allocation0]]
  $region30: #{tpu_custom_call.1} parent=0
    _
  %s6 = ssub.s32 1, %s4
  %s7 = scalar_select 0, %s6, %s4
  $region1: #{tpu_custom_call.1} parent=0
    #allocation2 [shape = 'u8[32768]{0}', space=vmem, size = 0x8000, scoped, tag = 'input window, operand 0, single buffered']
    #allocation3 [shape = 's32[1]{0}', space=sflag, size = 0x4, scoped, tag = 'scoped memory for tpu_custom_call.1']
    #allocation4 [shape = 's32[1]{0}', space=sflag, size = 0x4, scoped, tag = 'scoped memory for tpu_custom_call.1']
    #allocation5 [shape = 'u8[32768]{0}', space=vmem, size = 0x8000, scoped, tag = 'input window, operand 1, single buffered']
    #allocation6 [shape = 's32[1]{0}', space=sflag, size = 0x4, scoped, tag = 'scoped memory for tpu_custom_call.1']
    #allocation7 [shape = 'u8[65536]{0}', space=vmem, size = 0x10000, scoped, tag = 'output window, operand 0, single buffered']
    %8 = vsyncpa [#allocation3], 0
    %9 = vsyncpa [#allocation6], 0
    %10 = vsyncpa [#allocation4], 0
    // Predicated region
    $region2: #{tpu_custom_call.1} parent=1 // pred_check
      _
    $region3: #{tpu_custom_call.1} parent=1 // pred_check_branch
      %12 = sbr.rel (0) target = $region5
    $region4: #{tpu_custom_call.1} parent=1 // pred_region
      %s14 = ssub.s32 1024, 1024
      %15 = vsyncadd [#allocation3], %s14
      %s16 = sshll.u32 [#allocation2], 4
      %s17 = int_to_ptr.vmem [resolvable:$true] %s16
      %22 = dma.hbm_to_vmem [thread:$0]  %s0, 1024, %s17, [#allocation3], 64, 64, 4
    $region5: #{tpu_custom_call.1} parent=1 // pred_fallthru
      _
    // Predicated region
    $region6: #{tpu_custom_call.1} parent=1 // pred_check
      _
    $region7: #{tpu_custom_call.1} parent=1 // pred_check_branch
      %24 = sbr.rel (0) target = $region9
    $region8: #{tpu_custom_call.1} parent=1 // pred_region
      %s26 = ssub.s32 1024, 1024
      %27 = vsyncadd [#allocation6], %s26
      %s28 = sshll.u32 [#allocation5], 4
      %s29 = int_to_ptr.vmem [resolvable:$true] %s28
      %34 = dma.hbm_to_vmem [thread:$0]  %s1, 1024, %s29, [#allocation6], 64, 64, 4
    $region9: #{tpu_custom_call.1} parent=1 // pred_fallthru
      _
    // Predicated region
    $region10: #{tpu_custom_call.1} parent=1 // pred_check
      _
    $region11: #{tpu_custom_call.1} parent=1 // pred_check_branch
      %36 = sbr.rel (0) target = $region13
    $region12: #{tpu_custom_call.1} parent=1 // pred_region
      _
    $region13: #{tpu_custom_call.1} parent=1 // pred_fallthru
      _
    // Predicated region
    $region14: #{tpu_custom_call.1} parent=1 // pred_check
      _
    $region15: #{tpu_custom_call.1} parent=1 // pred_check_branch
      %38 = sbr.rel (0) target = $region17
    $region16: #{tpu_custom_call.1} parent=1 // pred_region
      %39 = dma.done [#allocation3], 1024
    $region17: #{tpu_custom_call.1} parent=1 // pred_fallthru
      _
    // Predicated region
    $region18: #{tpu_custom_call.1} parent=1 // pred_check
      _
    $region19: #{tpu_custom_call.1} parent=1 // pred_check_branch
      %41 = sbr.rel (0) target = $region21
    $region20: #{tpu_custom_call.1} parent=1 // pred_region
      %42 = dma.done [#allocation6], 1024
    $region21: #{tpu_custom_call.1} parent=1 // pred_fallthru
      _
    %v44 = vld [vmem:[#allocation2] sm:$0xf]
    %v45 = vld [vmem:[#allocation2 + $0x4] sm:$0xf]
    %v46 = vld [vmem:[#allocation2 + $0x8] sm:$0xf]
    %v47 = vld [vmem:[#allocation2 + $0xc] sm:$0xf]
    %v48 = vld [vmem:[#allocation2 + $0x10] sm:$0xf]
    %v49 = vld [vmem:[#allocation2 + $0x14] sm:$0xf]
    %v50 = vld [vmem:[#allocation2 + $0x18] sm:$0xf]
    %v51 = vld [vmem:[#allocation2 + $0x1c] sm:$0xf]
    %v52 = vld [vmem:[#allocation2 + $0x20] sm:$0xf]
    %v53 = vld [vmem:[#allocation2 + $0x24] sm:$0xf]
    %v54 = vld [vmem:[#allocation2 + $0x28] sm:$0xf]
    %v55 = vld [vmem:[#allocation2 + $0x2c] sm:$0xf]
    %v56 = vld [vmem:[#allocation2 + $0x30] sm:$0xf]
    %v57 = vld [vmem:[#allocation2 + $0x34] sm:$0xf]
    %v58 = vld [vmem:[#allocation2 + $0x38] sm:$0xf]
    %v59 = vld [vmem:[#allocation2 + $0x3c] sm:$0xf]
    %v60 = vld [vmem:[#allocation5] sm:$0xf]
    %v61 = vld [vmem:[#allocation5 + $0x4] sm:$0xf]
    %v62 = vld [vmem:[#allocation5 + $0x8] sm:$0xf]
    %v63 = vld [vmem:[#allocation5 + $0xc] sm:$0xf]
    %v64 = vld [vmem:[#allocation5 + $0x10] sm:$0xf]
    %v65 = vld [vmem:[#allocation5 + $0x14] sm:$0xf]
    %v66 = vld [vmem:[#allocation5 + $0x18] sm:$0xf]
    %v67 = vld [vmem:[#allocation5 + $0x1c] sm:$0xf]
    %v68 = vld [vmem:[#allocation5 + $0x20] sm:$0xf]
    %v69 = vld [vmem:[#allocation5 + $0x24] sm:$0xf]
    %v70 = vld [vmem:[#allocation5 + $0x28] sm:$0xf]
    %v71 = vld [vmem:[#allocation5 + $0x2c] sm:$0xf]
    %v72 = vld [vmem:[#allocation5 + $0x30] sm:$0xf]
    %v73 = vld [vmem:[#allocation5 + $0x34] sm:$0xf]
    %v74 = vld [vmem:[#allocation5 + $0x38] sm:$0xf]
    %v75 = vld [vmem:[#allocation5 + $0x3c] sm:$0xf]
    %v92 = vunpack.c.l.b16 %v44
    %v93 = vunpack.c.l.b16 %v45
    %v94 = vunpack.c.l.b16 %v46
    %v95 = vunpack.c.l.b16 %v47
    %v96 = vunpack.c.l.b16 %v48
    %v97 = vunpack.c.l.b16 %v49
    %v98 = vunpack.c.l.b16 %v50
    %v99 = vunpack.c.l.b16 %v51
    %v100 = vunpack.c.l.b16 %v52
    %v101 = vunpack.c.l.b16 %v53
    %v102 = vunpack.c.l.b16 %v54
    %v103 = vunpack.c.l.b16 %v55
    %v104 = vunpack.c.l.b16 %v56
    %v105 = vunpack.c.l.b16 %v57
    %v106 = vunpack.c.l.b16 %v58
    %v107 = vunpack.c.l.b16 %v59
    %v108 = vpack.c.b16 %v93, %v92
    %v109 = vpack.c.b16 %v95, %v94
    %v110 = vpack.c.b16 %v97, %v96
    %v111 = vpack.c.b16 %v99, %v98
    %v112 = vpack.c.b16 %v101, %v100
    %v113 = vpack.c.b16 %v103, %v102
    %v114 = vpack.c.b16 %v105, %v104
    %v115 = vpack.c.b16 %v107, %v106
    %v140 = vunpack.c.l.b16 %v60
    %v141 = vunpack.c.l.b16 %v61
    %v142 = vunpack.c.l.b16 %v62
    %v143 = vunpack.c.l.b16 %v63
    %v144 = vunpack.c.l.b16 %v64
    %v145 = vunpack.c.l.b16 %v65
    %v146 = vunpack.c.l.b16 %v66
    %v147 = vunpack.c.l.b16 %v67
    %v148 = vunpack.c.l.b16 %v68
    %v149 = vunpack.c.l.b16 %v69
    %v150 = vunpack.c.l.b16 %v70
    %v151 = vunpack.c.l.b16 %v71
    %v152 = vunpack.c.l.b16 %v72
    %v153 = vunpack.c.l.b16 %v73
    %v154 = vunpack.c.l.b16 %v74
    %v155 = vunpack.c.l.b16 %v75
    %v156 = vpack.c.b16 %v141, %v140
    %v157 = vpack.c.b16 %v143, %v142
    %v158 = vpack.c.b16 %v145, %v144
    %v159 = vpack.c.b16 %v147, %v146
    %v160 = vpack.c.b16 %v149, %v148
    %v161 = vpack.c.b16 %v151, %v150
    %v162 = vpack.c.b16 %v153, %v152
    %v163 = vpack.c.b16 %v155, %v154
    %172 = vmatprep.subr.bf16.mxu0 0
    %173 = vmatpush1.bf16.msra.mxu0 %v156
    %174 = vmatprep.subr.bf16.mxu0 0
    %175 = vmatpush1.bf16.msra.mxu0 %v157
    %176 = vmatprep.subr.bf16.mxu0 0
    %177 = vmatpush1.bf16.msra.mxu0 %v158
    %178 = vmatprep.subr.bf16.mxu0 0
    %179 = vmatpush1.bf16.msra.mxu0 %v159
    %180 = vmatprep.subr.bf16.mxu0 0
    %181 = vmatpush1.bf16.msra.mxu0 %v160
    %182 = vmatprep.subr.bf16.mxu0 0
    %183 = vmatpush1.bf16.msra.mxu0 %v161
    %184 = vmatprep.subr.bf16.mxu0 0
    %185 = vmatpush1.bf16.msra.mxu0 %v162
    %186 = vmatprep.subr.bf16.mxu0 0
    %187 = vmatpush1.bf16.msra.mxu0 %v163
    %188 = vmatprep.subr.bf16.mxu0 0
    %189 = vmatpush1.bf16.msra.mxu0 0
    %190 = vmatprep.subr.bf16.mxu0 0
    %191 = vmatpush1.bf16.msra.mxu0 0
    %192 = vmatprep.subr.bf16.mxu0 0
    %193 = vmatpush1.bf16.msra.mxu0 0
    %194 = vmatprep.subr.bf16.mxu0 0
    %195 = vmatpush1.bf16.msra.mxu0 0
    %196 = vmatprep.subr.bf16.mxu0 0
    %197 = vmatpush1.bf16.msra.mxu0 0
    %198 = vmatprep.subr.bf16.mxu0 0
    %199 = vmatpush1.bf16.msra.mxu0 0
    %200 = vmatprep.subr.bf16.mxu0 0
    %201 = vmatpush1.bf16.msra.mxu0 0
    %202 = vmatprep.subr.bf16.mxu0 0
    %203 = vmatpush1.bf16.msra.mxu0 0
    %204 = vmatprep.mubr.bf16.mxu0 0
    %205 = vmatmul.mubr.bf16.gmra.mrb[0].mxu0 %v108
    %v206 = vpop.f32.mrb[0].mxu0
    %v207 = vadd.f32 0.0, %v206
    %v208 = vpop.f32.mrb[0].mxu0
    %v209 = vpop.f32.mrb[0].mxu0
    %v210 = vadd.f32 0.0, %v209
    %v211 = vpop.f32.mrb[0].mxu0
    %212 = vmatprep.mubr.bf16.mxu0 0
    %213 = vmatmul.mubr.bf16.gmra.mrb[0].mxu0 %v109
    %v214 = vpop.f32.mrb[0].mxu0
    %v215 = vadd.f32 0.0, %v214
    %v216 = vpop.f32.mrb[0].mxu0
    %v217 = vpop.f32.mrb[0].mxu0
    %v218 = vadd.f32 0.0, %v217
    %v219 = vpop.f32.mrb[0].mxu0
    %220 = vmatprep.mubr.bf16.mxu0 0
    %221 = vmatmul.mubr.bf16.gmra.mrb[0].mxu0 %v110
    %v222 = vpop.f32.mrb[0].mxu0
    %v223 = vadd.f32 0.0, %v222
    %v224 = vpop.f32.mrb[0].mxu0
    %v225 = vpop.f32.mrb[0].mxu0
    %v226 = vadd.f32 0.0, %v225
    %v227 = vpop.f32.mrb[0].mxu0
    %228 = vmatprep.mubr.bf16.mxu0 0
    %229 = vmatmul.mubr.bf16.gmra.mrb[0].mxu0 %v111
    %v230 = vpop.f32.mrb[0].mxu0
    %v231 = vadd.f32 0.0, %v230
    %v232 = vpop.f32.mrb[0].mxu0
    %v233 = vpop.f32.mrb[0].mxu0
    %v234 = vadd.f32 0.0, %v233
    %v235 = vpop.f32.mrb[0].mxu0
    %236 = vmatprep.mubr.bf16.mxu0 0
    %237 = vmatmul.mubr.bf16.gmra.mrb[0].mxu0 %v112
    %v238 = vpop.f32.mrb[0].mxu0
    %v239 = vadd.f32 0.0, %v238
    %v240 = vpop.f32.mrb[0].mxu0
    %v241 = vpop.f32.mrb[0].mxu0
    %v242 = vadd.f32 0.0, %v241
    %v243 = vpop.f32.mrb[0].mxu0
    %244 = vmatprep.mubr.bf16.mxu0 0
    %245 = vmatmul.mubr.bf16.gmra.mrb[0].mxu0 %v113
    %v246 = vpop.f32.mrb[0].mxu0
    %v247 = vadd.f32 0.0, %v246
    %v248 = vpop.f32.mrb[0].mxu0
    %v249 = vpop.f32.mrb[0].mxu0
    %v250 = vadd.f32 0.0, %v249
    %v251 = vpop.f32.mrb[0].mxu0
    %252 = vmatprep.mubr.bf16.mxu0 0
    %253 = vmatmul.mubr.bf16.gmra.mrb[0].mxu0 %v114
    %v254 = vpop.f32.mrb[0].mxu0
    %v255 = vadd.f32 0.0, %v254
    %v256 = vpop.f32.mrb[0].mxu0
    %v257 = vpop.f32.mrb[0].mxu0
    %v258 = vadd.f32 0.0, %v257
    %v259 = vpop.f32.mrb[0].mxu0
    %260 = vmatprep.mubr.bf16.mxu0 0
    %261 = vmatmul.mubr.bf16.gmra.mrb[0].mxu0 %v115
    %v262 = vpop.f32.mrb[0].mxu0
    %v263 = vadd.f32 0.0, %v262
    %v264 = vpop.f32.mrb[0].mxu0
    %v265 = vpop.f32.mrb[0].mxu0
    %v266 = vadd.f32 0.0, %v265
    %v267 = vpop.f32.mrb[0].mxu0
    %268 = vdwg.mxu0
    %v269 = vld [vmem:[%s2] sm:$0x7]
    %v270 = vlaneseq
    %v271 = vshrl.u32 %v270, 7
    %v272 = vsub.s32 0, %v271
    %v273 = vrot.slane %v269, %v272
    %v274 = vmul.f32 %v207, %v273
    %v275 = vmul.f32 %v210, %v273
    %v276 = vmul.f32 %v215, %v273
    %v277 = vmul.f32 %v218, %v273
    %v278 = vmul.f32 %v223, %v273
    %v279 = vmul.f32 %v226, %v273
    %v280 = vmul.f32 %v231, %v273
    %v281 = vmul.f32 %v234, %v273
    %v282 = vmul.f32 %v239, %v273
    %v283 = vmul.f32 %v242, %v273
    %v284 = vmul.f32 %v247, %v273
    %v285 = vmul.f32 %v250, %v273
    %v286 = vmul.f32 %v255, %v273
    %v287 = vmul.f32 %v258, %v273
    %v288 = vmul.f32 %v263, %v273
    %v289 = vmul.f32 %v266, %v273
    %v290 = vlaneseq
    %v291 = vshrl.u32 %v290, 7
    %v292 = vsub.s32 1, %v291
    %v293 = vrot.slane %v269, %v292
    %v294 = vadd.f32 %v274, %v293
    %v295 = vadd.f32 %v275, %v293
    %v296 = vadd.f32 %v276, %v293
    %v297 = vadd.f32 %v277, %v293
    %v298 = vadd.f32 %v278, %v293
    %v299 = vadd.f32 %v279, %v293
    %v300 = vadd.f32 %v280, %v293
    %v301 = vadd.f32 %v281, %v293
    %v302 = vadd.f32 %v282, %v293
    %v303 = vadd.f32 %v283, %v293
    %v304 = vadd.f32 %v284, %v293
    %v305 = vadd.f32 %v285, %v293
    %v306 = vadd.f32 %v286, %v293
    %v307 = vadd.f32 %v287, %v293
    %v308 = vadd.f32 %v288, %v293
    %v309 = vadd.f32 %v289, %v293
    %vm310 = vcmp.ge.f32.partialorder %v294, 0.0
    %vm311 = vcmp.ge.f32.partialorder %v295, 0.0
    %vm312 = vcmp.ge.f32.partialorder %v296, 0.0
    %vm313 = vcmp.ge.f32.partialorder %v297, 0.0
    %vm314 = vcmp.ge.f32.partialorder %v298, 0.0
    %vm315 = vcmp.ge.f32.partialorder %v299, 0.0
    %vm316 = vcmp.ge.f32.partialorder %v300, 0.0
    %vm317 = vcmp.ge.f32.partialorder %v301, 0.0
    %vm318 = vcmp.ge.f32.partialorder %v302, 0.0
    %vm319 = vcmp.ge.f32.partialorder %v303, 0.0
    %vm320 = vcmp.ge.f32.partialorder %v304, 0.0
    %vm321 = vcmp.ge.f32.partialorder %v305, 0.0
    %vm322 = vcmp.ge.f32.partialorder %v306, 0.0
    %vm323 = vcmp.ge.f32.partialorder %v307, 0.0
    %vm324 = vcmp.ge.f32.partialorder %v308, 0.0
    %vm325 = vcmp.ge.f32.partialorder %v309, 0.0
    %v326 = vlaneseq
    %v327 = vshrl.u32 %v326, 7
    %v328 = vsub.s32 2, %v327
    %v329 = vrot.slane %v269, %v328
    %v330 = vmul.f32 %v329, %v294
    %v331 = vmul.f32 %v329, %v295
    %v332 = vmul.f32 %v329, %v296
    %v333 = vmul.f32 %v329, %v297
    %v334 = vmul.f32 %v329, %v298
    %v335 = vmul.f32 %v329, %v299
    %v336 = vmul.f32 %v329, %v300
    %v337 = vmul.f32 %v329, %v301
    %v338 = vmul.f32 %v329, %v302
    %v339 = vmul.f32 %v329, %v303
    %v340 = vmul.f32 %v329, %v304
    %v341 = vmul.f32 %v329, %v305
    %v342 = vmul.f32 %v329, %v306
    %v343 = vmul.f32 %v329, %v307
    %v344 = vmul.f32 %v329, %v308
    %v345 = vmul.f32 %v329, %v309
    %v346 = vsel %vm310, %v294, %v330
    %v347 = vsel %vm311, %v295, %v331
    %v348 = vsel %vm312, %v296, %v332
    %v349 = vsel %vm313, %v297, %v333
    %v350 = vsel %vm314, %v298, %v334
    %v351 = vsel %vm315, %v299, %v335
    %v352 = vsel %vm316, %v300, %v336
    %v353 = vsel %vm317, %v301, %v337
    %v354 = vsel %vm318, %v302, %v338
    %v355 = vsel %vm319, %v303, %v339
    %v356 = vsel %vm320, %v304, %v340
    %v357 = vsel %vm321, %v305, %v341
    %v358 = vsel %vm322, %v306, %v342
    %v359 = vsel %vm323, %v307, %v343
    %v360 = vsel %vm324, %v308, %v344
    %v361 = vsel %vm325, %v309, %v345
    %362 = vst [vmem:[#allocation7] sm:$0xff] %v346
    %363 = vst [vmem:[#allocation7 + $0x8] sm:$0xff] %v347
    %364 = vst [vmem:[#allocation7 + $0x10] sm:$0xff] %v348
    %365 = vst [vmem:[#allocation7 + $0x18] sm:$0xff] %v349
    %366 = vst [vmem:[#allocation7 + $0x20] sm:$0xff] %v350
    %367 = vst [vmem:[#allocation7 + $0x28] sm:$0xff] %v351
    %368 = vst [vmem:[#allocation7 + $0x30] sm:$0xff] %v352
    %369 = vst [vmem:[#allocation7 + $0x38] sm:$0xff] %v353
    %370 = vst [vmem:[#allocation7 + $0x40] sm:$0xff] %v354
    %371 = vst [vmem:[#allocation7 + $0x48] sm:$0xff] %v355
    %372 = vst [vmem:[#allocation7 + $0x50] sm:$0xff] %v356
    %373 = vst [vmem:[#allocation7 + $0x58] sm:$0xff] %v357
    %374 = vst [vmem:[#allocation7 + $0x60] sm:$0xff] %v358
    %375 = vst [vmem:[#allocation7 + $0x68] sm:$0xff] %v359
    %376 = vst [vmem:[#allocation7 + $0x70] sm:$0xff] %v360
    %377 = vst [vmem:[#allocation7 + $0x78] sm:$0xff] %v361
    // Predicated region
    $region22: #{tpu_custom_call.1} parent=1 // pred_check
      _
    $region23: #{tpu_custom_call.1} parent=1 // pred_check_branch
      %379 = sbr.rel (0) target = $region25
    $region24: #{tpu_custom_call.1} parent=1 // pred_region
      %s381 = ssub.s32 2048, 2048
      %382 = vsyncadd [#allocation4], %s381
      %s383 = sshll.u32 [#allocation7], 4
      %s384 = int_to_ptr.vmem [resolvable:$true] %s383
      %389 = dma.vmem_to_hbm [thread:$0]  %s384, 2048, %s3, [#allocation4], 128, 128, 8
    $region25: #{tpu_custom_call.1} parent=1 // pred_fallthru
      _
    // Predicated region
    $region26: #{tpu_custom_call.1} parent=1 // pred_check
      _
    $region27: #{tpu_custom_call.1} parent=1 // pred_check_branch
      %391 = sbr.rel (0) target = $region29
    $region28: #{tpu_custom_call.1} parent=1 // pred_region
      %392 = dma.done [#allocation4], 2048
    $region29: #{tpu_custom_call.1} parent=1 // pred_fallthru
      _
    %393 = vsyncpa [#allocation3], 1
    %394 = vsyncpa [#allocation6], 1
    %395 = vsyncpa [#allocation4], 1

</llo_original>
